<compile_context>
chip_gen: v6e
topology: v6e:2x2x1
jax: 0.10.0
libtpu: 0.0.40
codegen_flags: <defaults>
</compile_context>

<pallas_src>
import jax
import jax.numpy as jnp
from jax.experimental import pallas as pl
from jax.experimental.pallas import tpu as pltpu


def _round_up(v, m):
    return (v + m - 1) // m * m


# ---------------------------------------------------------------------------
# Kernels
# ---------------------------------------------------------------------------

def _residual_tiled_kernel(xb_ref, w_ref, b_ref, xr_ref, o_ref):
    """Tiled (x @ W + b) + x.

    The f32 output block is resident across the (last, "arbitrary") k axis and
    is used directly as the accumulator; residual + bias are folded into the
    k == 0 init, so the steady-state body is a single MXU dot + f32 add.
    """
    k = pl.program_id(2)

    @pl.when(k == 0)
    def _():
        o_ref[...] = xr_ref[...] + b_ref[...]          # f32 residual + bias init

    o_ref[...] += jnp.dot(xb_ref[...], w_ref[...],      # bf16 x bf16 -> f32
                          preferred_element_type=jnp.float32)


def _residual_single_block_kernel(x_ref, w_ref, b_ref, o_ref):
    """Whole problem in one tile: no grid loop, one read of x, f32 residual."""
    x = x_ref[...]                                       # f32 tile
    o_ref[...] = (jnp.dot(x.astype(jnp.bfloat16), w_ref[...],
                          preferred_element_type=jnp.float32)
                  + x + b_ref[...])


# ---------------------------------------------------------------------------
# Wrapper / factory
# ---------------------------------------------------------------------------

def make_residual_linear(w, b, *, tm=512, tn=1024):
    """Builds out = (x @ w + b) + x with weight padding + bf16 cast done ONCE.

    w: [H, H] f32, b: [1, H] (or [H]) f32.  Returns apply(x) for x[..., H].
    """
    w = jnp.asarray(w, jnp.float32)
    b = jnp.asarray(b, jnp.float32)
    H = w.shape[0]
    assert w.shape == (H, H)
    b = b.reshape(1, H)

    # Lane-dense N/K tile (multiple of 128); single padded hidden size Hp.
    tnk = min(tn, _round_up(H, 128))
    Hp = _round_up(H, tnk)

    # ---- hoisted, cached weight prep (runs once, not per call) -------------
    if Hp != H:
        w_prep = jnp.pad(w, ((0, Hp - H), (0, Hp - H)))
        b_prep = jnp.pad(b, ((0, 0), (0, Hp - H)))
    else:
        w_prep, b_prep = w, b
    w_bf = w_prep.astype(jnp.bfloat16)      # bf16 MXU operand, half the HBM bytes
    w_bf, b_prep = jax.block_until_ready((w_bf, b_prep))

    tm_max = tm

    @jax.jit
    def apply2d(x2d):
        M = x2d.shape[0]
        Mp8 = _round_up(M, 8)

        # ---- single-block fast path: whole problem is one tile -------------
        if H <= tnk and Mp8 <= tm_max:
            x_p = x2d if Hp == H else jnp.pad(x2d, ((0, 0), (0, Hp - H)))
            out = pl.pallas_call(
                _residual_single_block_kernel,
                out_shape=jax.ShapeDtypeStruct((M, Hp), jnp.float32),
            )(x_p, w_bf, b_prep)
            return out[:, :H]

        # ---- general tiled path --------------------------------------------
        tm_ = min(tm_max, Mp8)
        Mp = _round_up(M, tm_)
        x_p = x2d if (Mp, Hp) == (M, H) else jnp.pad(
            x2d, ((0, Mp - M), (0, Hp - H)))
        x_bf = x_p.astype(jnp.bfloat16)       # bf16 matmul operand (halved reads)
        grid = (Mp // tm_, Hp // tnk, Hp // tnk)

        out = pl.pallas_call(
            _residual_tiled_kernel,
            out_shape=jax.ShapeDtypeStruct((Mp, Hp), jnp.float32),
            grid_spec=pltpu.PrefetchScalarGridSpec(
                num_scalar_prefetch=0,
                grid=grid,
                in_specs=[
                    pl.BlockSpec((tm_, tnk), lambda i, j, k: (i, k)),   # x  (bf16)
                    pl.BlockSpec((tnk, tnk), lambda i, j, k: (k, j)),   # W  (bf16)
                    pl.BlockSpec((1, tnk), lambda i, j, k: (0, j)),     # b  (f32)
                    pl.BlockSpec((tm_, tnk), lambda i, j, k: (i, j)),   # x  (f32 residual)
                ],
                out_specs=pl.BlockSpec((tm_, tnk), lambda i, j, k: (i, j)),
            ),
            compiler_params=pltpu.CompilerParams(
                dimension_semantics=("parallel", "parallel", "arbitrary"),
                vmem_limit_bytes=32 * 1024 * 1024,
            ),
        )(x_bf, w_bf, b_prep, x_p)
        return out[:M, :H]

    def apply(x):
        lead = x.shape[:-1]
        y = apply2d(x.reshape(-1, x.shape[-1]))
        return y.reshape(*lead, H)

    return apply


if __name__ == "__main__":
    # Small shapes consistent with the module: batch=2, seq=8, hidden=32.
    batch, seq, hidden = 2, 8, 32

    key = jax.random.PRNGKey(0)
    kx, kw, kb, kx2, kw2, kb2 = jax.random.split(key, 6)

    x = jax.random.normal(kx, (batch, seq, hidden), dtype=jnp.float32)
    # Deterministic parameter init for fn = Linear(hidden, hidden).
    w = jax.random.normal(kw, (hidden, hidden), dtype=jnp.float32) * 0.02
    b = jax.random.normal(kb, (1, hidden), dtype=jnp.float32) * 0.01

    # Weight prep is hoisted/cached here (runs once).
    residual = make_residual_linear(w, b)

    out = residual(x)                         # single-block fast path
    out = jax.block_until_ready(out)

    x2d = x.reshape(batch * seq, hidden)
    ref = (x2d @ w + b) + x2d                 # Residual semantics: fn(x) + x
    assert out.shape == x.shape
    assert jnp.allclose(out.reshape(-1, hidden), ref, atol=1e-2, rtol=1e-2), \
        "fast-path mismatch vs reference"

    # Also exercise the general tiled path (multi-tile i/j + k accumulation)
    # with deliberately tiny tiles so it stays cheap.
    M2, H2 = 16, 256
    x2 = jax.random.normal(kx2, (M2, H2), dtype=jnp.float32)
    w2 = jax.random.normal(kw2, (H2, H2), dtype=jnp.float32) * 0.02
    b2 = jax.random.normal(kb2, (1, H2), dtype=jnp.float32) * 0.01
    residual2 = make_residual_linear(w2, b2, tm=8, tn=128)   # grid (2, 2, 2)
    out2 = jax.block_until_ready(residual2(x2))
    ref2 = (x2 @ w2 + b2) + x2
    assert jnp.allclose(out2, ref2, atol=1e-2, rtol=1e-2), \
        "tiled-path mismatch vs reference"

    print("KERNEL_OK")
</pallas_src>

<mosaic_0001>
module attributes {stable_mosaic.version = 11 : i64} {
  func.func @_residual_single_block_kernel(%arg0: memref<16x128xf32, #tpu.memory_space<vmem>>, %arg1: memref<128x128xbf16, #tpu.memory_space<vmem>>, %arg2: memref<1x128xf32, #tpu.memory_space<vmem>>, %arg3: memref<16x128xf32, #tpu.memory_space<vmem>>) attributes {dimension_semantics = [], scalar_prefetch = 0 : i64, scratch_operands = 0 : i64, tpu.core_type = #tpu.core_type<tc>} {
    %c0 = arith.constant 0 : index
    %c0_0 = arith.constant 0 : index
    %0 = vector.load %arg0[%c0, %c0_0] : memref<16x128xf32, #tpu.memory_space<vmem>>, vector<16x128xf32>
    %1 = arith.truncf %0 : vector<16x128xf32> to vector<16x128xbf16>
    %c0_1 = arith.constant 0 : index
    %c0_2 = arith.constant 0 : index
    %2 = vector.load %arg1[%c0_1, %c0_2] : memref<128x128xbf16, #tpu.memory_space<vmem>>, vector<128x128xbf16>
    %cst = arith.constant dense<0.000000e+00> : vector<16x128xf32>
    %3 = tpu.matmul %1, %2, %cst {dimension_numbers = #tpu.dot_dimension_numbers<[1], [0], [0], [1], [0, 0, 1, 1], [], []>} : vector<16x128xbf16>, vector<128x128xbf16>, vector<16x128xf32> -> vector<16x128xf32>
    %4 = arith.addf %3, %0 : vector<16x128xf32>
    %c0_3 = arith.constant 0 : index
    %c0_4 = arith.constant 0 : index
    %5 = vector.load %arg2[%c0_3, %c0_4] : memref<1x128xf32, #tpu.memory_space<vmem>>, vector<1x128xf32>
    %6 = vector.broadcast %5 : vector<1x128xf32> to vector<16x128xf32>
    %7 = arith.addf %4, %6 : vector<16x128xf32>
    %c0_5 = arith.constant 0 : index
    %c0_6 = arith.constant 0 : index
    %8 = vector.load %arg3[%c0_5, %c0_6] : memref<16x128xf32, #tpu.memory_space<vmem>>, vector<16x128xf32>
    tpu.vector_store %arg3[%c0_5, %c0_6], %7 {strides = array<i32>} : memref<16x128xf32, #tpu.memory_space<vmem>>, vector<16x128xf32>,
    return
  }
}

</mosaic_0001>

<llo_original>
// kernel: apply2d.1
$region0: #{apply2d.1}
  #allocation0 [shape = 'u32[]', space=smem, size = 0x4, offset = 0x4, fixed_abs, tag = 'smem constant byte address 0x4 - core index']
  #allocation1 [shape = 'u32[144,128]{1,0:T(1,128)}', space=vmem, size = 0x12000, scoped, tag = 'internal scratch']
  %s0 = inlined_call_operand.vmem [shape: f32[16,128], index: 0, kind: input, shape index: {}]
  %s1 = inlined_call_operand.hbm [shape: bf16[128,128], index: 1, kind: input, shape index: {}]
  %s2 = inlined_call_operand.vmem [shape: f32[1,128], index: 2, kind: input, shape index: {}]
  %s3 = inlined_call_operand.hbm [shape: f32[16,128], index: 3, kind: output, shape index: {}]
  %s4 = sld [smem:[#allocation0]]
  $region26: #{apply2d.1} parent=0
    _
  %s6 = ssub.s32 1, %s4
  %s7 = scalar_select 0, %s6, %s4
  $region1: #{apply2d.1} parent=0
    #allocation2 [shape = 'u8[32768]{0}', space=vmem, size = 0x8000, scoped, tag = 'input window, operand 1, single buffered']
    #allocation3 [shape = 's32[1]{0}', space=sflag, size = 0x4, scoped, tag = 'scoped memory for apply2d.1']
    #allocation4 [shape = 's32[1]{0}', space=sflag, size = 0x4, scoped, tag = 'scoped memory for apply2d.1']
    #allocation5 [shape = 'u8[8192]{0}', space=vmem, size = 0x2000, scoped, tag = 'output window, operand 0, single buffered']
    %8 = vsyncpa [#allocation3], 0
    %9 = vsyncpa [#allocation4], 0
    // Predicated region
    $region2: #{apply2d.1} parent=1 // pred_check
      _
    $region3: #{apply2d.1} parent=1 // pred_check_branch
      %11 = sbr.rel (0) target = $region5
    $region4: #{apply2d.1} parent=1 // pred_region
      _
    $region5: #{apply2d.1} parent=1 // pred_fallthru
      _
    // Predicated region
    $region6: #{apply2d.1} parent=1 // pred_check
      _
    $region7: #{apply2d.1} parent=1 // pred_check_branch
      %13 = sbr.rel (0) target = $region9
    $region8: #{apply2d.1} parent=1 // pred_region
      %s15 = ssub.s32 1024, 1024
      %16 = vsyncadd [#allocation3], %s15
      %s17 = sshll.u32 [#allocation2], 4
      %s18 = int_to_ptr.vmem [resolvable:$true] %s17
      %23 = dma.hbm_to_vmem [thread:$0]  %s1, 1024, %s18, [#allocation3], 64, 64, 4
    $region9: #{apply2d.1} parent=1 // pred_fallthru
      _
    // Predicated region
    $region10: #{apply2d.1} parent=1 // pred_check
      _
    $region11: #{apply2d.1} parent=1 // pred_check_branch
      %25 = sbr.rel (0) target = $region13
    $region12: #{apply2d.1} parent=1 // pred_region
      _
    $region13: #{apply2d.1} parent=1 // pred_fallthru
      _
    // Predicated region
    $region14: #{apply2d.1} parent=1 // pred_check
      _
    $region15: #{apply2d.1} parent=1 // pred_check_branch
      %27 = sbr.rel (0) target = $region17
    $region16: #{apply2d.1} parent=1 // pred_region
      %28 = dma.done [#allocation3], 1024
    $region17: #{apply2d.1} parent=1 // pred_fallthru
      _
    %v30 = vld [vmem:[%s0] sm:$0xff]
    %v31 = vld [vmem:[%s0 + $0x8] sm:$0xff]
    %v32 = vpack.c.bf16 %v31, %v30
    %v33 = vld [vmem:[#allocation2] sm:$0xf]
    %v34 = vld [vmem:[#allocation2 + $0x4] sm:$0xf]
    %v35 = vld [vmem:[#allocation2 + $0x8] sm:$0xf]
    %v36 = vld [vmem:[#allocation2 + $0xc] sm:$0xf]
    %v37 = vld [vmem:[#allocation2 + $0x10] sm:$0xf]
    %v38 = vld [vmem:[#allocation2 + $0x14] sm:$0xf]
    %v39 = vld [vmem:[#allocation2 + $0x18] sm:$0xf]
    %v40 = vld [vmem:[#allocation2 + $0x1c] sm:$0xf]
    %v41 = vld [vmem:[#allocation2 + $0x20] sm:$0xf]
    %v42 = vld [vmem:[#allocation2 + $0x24] sm:$0xf]
    %v43 = vld [vmem:[#allocation2 + $0x28] sm:$0xf]
    %v44 = vld [vmem:[#allocation2 + $0x2c] sm:$0xf]
    %v45 = vld [vmem:[#allocation2 + $0x30] sm:$0xf]
    %v46 = vld [vmem:[#allocation2 + $0x34] sm:$0xf]
    %v47 = vld [vmem:[#allocation2 + $0x38] sm:$0xf]
    %v48 = vld [vmem:[#allocation2 + $0x3c] sm:$0xf]
    %v65 = vunpack.c.l.b16 %v33
    %v66 = vunpack.c.l.b16 %v34
    %v67 = vunpack.c.l.b16 %v35
    %v68 = vunpack.c.l.b16 %v36
    %v69 = vunpack.c.l.b16 %v37
    %v70 = vunpack.c.l.b16 %v38
    %v71 = vunpack.c.l.b16 %v39
    %v72 = vunpack.c.l.b16 %v40
    %v73 = vunpack.c.l.b16 %v41
    %v74 = vunpack.c.l.b16 %v42
    %v75 = vunpack.c.l.b16 %v43
    %v76 = vunpack.c.l.b16 %v44
    %v77 = vunpack.c.l.b16 %v45
    %v78 = vunpack.c.l.b16 %v46
    %v79 = vunpack.c.l.b16 %v47
    %v80 = vunpack.c.l.b16 %v48
    %v81 = vpack.c.b16 %v66, %v65
    %v82 = vpack.c.b16 %v68, %v67
    %v83 = vpack.c.b16 %v70, %v69
    %v84 = vpack.c.b16 %v72, %v71
    %v85 = vpack.c.b16 %v74, %v73
    %v86 = vpack.c.b16 %v76, %v75
    %v87 = vpack.c.b16 %v78, %v77
    %v88 = vpack.c.b16 %v80, %v79
    %97 = vmatprep.subr.bf16.mxu0 0
    %98 = vmatpush1.bf16.msra.mxu0 %v88
    %99 = vmatprep.subr.bf16.mxu0 0
    %100 = vmatpush1.bf16.msra.mxu0 %v87
    %101 = vmatprep.subr.bf16.mxu0 0
    %102 = vmatpush1.bf16.msra.mxu0 %v86
    %103 = vmatprep.subr.bf16.mxu0 0
    %104 = vmatpush1.bf16.msra.mxu0 %v85
    %105 = vmatprep.subr.bf16.mxu0 0
    %106 = vmatpush1.bf16.msra.mxu0 %v84
    %107 = vmatprep.subr.bf16.mxu0 0
    %108 = vmatpush1.bf16.msra.mxu0 %v83
    %109 = vmatprep.subr.bf16.mxu0 0
    %110 = vmatpush1.bf16.msra.mxu0 %v82
    %111 = vmatprep.subr.bf16.mxu0 0
    %112 = vmatpush1.bf16.msra.mxu0 %v81
    %113 = vmatprep.subr.bf16.mxu0 0
    %114 = vmatpush2.bf16.msra.mxu0 0
    %115 = vmatprep.subr.bf16.mxu0 0
    %116 = vmatpush2.bf16.msra.mxu0 0
    %117 = vmatprep.subr.bf16.mxu0 0
    %118 = vmatpush2.bf16.msra.mxu0 0
    %119 = vmatprep.subr.bf16.mxu0 0
    %120 = vmatpush2.bf16.msra.mxu0 0
    %121 = vmatprep.subr.bf16.mxu0 0
    %122 = vmatpush2.bf16.msra.mxu0 0
    %123 = vmatprep.subr.bf16.mxu0 0
    %124 = vmatpush2.bf16.msra.mxu0 0
    %125 = vmatprep.subr.bf16.mxu0 0
    %126 = vmatpush2.bf16.msra.mxu0 0
    %127 = vmatprep.subr.bf16.mxu0 0
    %128 = vmatpush2.bf16.msra.mxu0 0
    %129 = vmatprep.mubr.bf16.mxu0 0
    %130 = vmatmul.mubr.bf16.gmra.mxu0 %v32
    %v131 = vpop.f32.mrf.mxu0
    %v132 = vadd.f32 %v30, %v131
    %v133 = vpop.f32.mrf.mxu0
    %v134 = vpop.f32.mrf.mxu0
    %v135 = vadd.f32 %v31, %v134
    %v136 = vpop.f32.mrf.mxu0
    %137 = vdwg.mxu0
    %v138 = vld [vmem:[%s2] sm:$0x1]
    %v140 = vlaneseq
    %v141 = vshrl.u32 %v140, 7
    %v142 = vsub.s32 0, %v141
    %v143 = vrot.slane %v138, %v142
    %v145 = vadd.f32 %v132, %v143
    %v146 = vadd.f32 %v135, %v143
    %147 = vst [vmem:[#allocation5] sm:$0xff] %v145
    %148 = vst [vmem:[#allocation5 + $0x8] sm:$0xff] %v146
    // Predicated region
    $region18: #{apply2d.1} parent=1 // pred_check
      _
    $region19: #{apply2d.1} parent=1 // pred_check_branch
      %150 = sbr.rel (0) target = $region21
    $region20: #{apply2d.1} parent=1 // pred_region
      %s152 = ssub.s32 256, 256
      %153 = vsyncadd [#allocation4], %s152
      %s154 = sshll.u32 [#allocation5], 4
      %s155 = int_to_ptr.vmem [resolvable:$true] %s154
      %160 = dma.vmem_to_hbm [thread:$0]  %s155, 256, %s3, [#allocation4], 128, 128, 8
    $region21: #{apply2d.1} parent=1 // pred_fallthru
      _
    // Predicated region
    $region22: #{apply2d.1} parent=1 // pred_check
      _
    $region23: #{apply2d.1} parent=1 // pred_check_branch
      %162 = sbr.rel (0) target = $region25
    $region24: #{apply2d.1} parent=1 // pred_region
      %163 = dma.done [#allocation4], 256
    $region25: #{apply2d.1} parent=1 // pred_fallthru
      _
    %164 = vsyncpa [#allocation3], 1
    %165 = vsyncpa [#allocation4], 1

</llo_original>
